<compile_context>
chip_gen: v6e
topology: v6e:2x2x1
jax: 0.10.0
libtpu: 0.0.40
codegen_flags: <defaults>
</compile_context>

<pallas_src>
import math

import jax
import jax.numpy as jnp
import numpy as np
from jax import lax
from jax.experimental import pallas as pl
from jax.experimental.pallas import tpu as pltpu

IN_CH = 4               # in_ch of DecoderBlock
LL_CH = 3               # recov_ll output channels (fixed to 3 in the module)
HF_CH = 3 * LL_CH       # hf_ch must be 9 for the iwt to be well defined
TOT_CH = LL_CH + HF_CH  # 12
K_TAPS = 9              # 3x3 conv taps

LANE_TILE_MAX = 4096    # lanes per grid step (multiple of 128)


def _round_up(x, m):
    return (x + m - 1) // m * m


def _haar_inverse_filters():
    """Haar inverse filter bank (4, 2, 2): [LL, LH, HL, HH]."""
    s = 1.0 / math.sqrt(2.0)
    L = np.array([[s, s]], dtype=np.float32)
    H = np.array([[-s, s]], dtype=np.float32)
    return np.stack([L.T @ L, L.T @ H, H.T @ L, H.T @ H], axis=0)


def _iwt_matrix_T():
    """(12, 12): output row (c*4 + dy*2 + dx)  <-  input rows [ll(3) | hf(9)].

    Matches conv_transpose2d(coeff, inv, stride=2) with a 2x2 kernel (no
    overlap, pad=0 for Haar, so the reflect-pad branch of iwt_level is dead).
    """
    inv = _haar_inverse_filters()
    M = np.zeros((TOT_CH, TOT_CH), dtype=np.float32)
    for c in range(LL_CH):
        for dy in range(2):
            for dx in range(2):
                row = c * 4 + dy * 2 + dx
                M[row, c] = inv[0, dy, dx]                           # LL coeff
                for k in range(3):
                    M[row, LL_CH + 3 * c + k] = inv[k + 1, dy, dx]   # LH/HL/HH
    return M


# ----------------------------- Pallas kernel --------------------------------

def decoder_kernel(x_ref, hf_ref, w_ref, bias_ref, scale_ref, mask_ref,
                   iwt_ref, out_ref):
    # x_ref:  (36, TN) im2col slab          w_ref:  (12, 36)
    # hf_ref: (12, TN) hf already in [-1,1] (rows 0..2 are zero dummies)
    # bias/scale/mask: (12, 1)              iwt_ref: (12, 12)
    # out_ref: (12, TN)
    acc = jnp.dot(w_ref[...], x_ref[...],
                  preferred_element_type=jnp.float32)            # fused 3x3 conv
    scaled = jnp.tanh(acc + bias_ref[...]) * scale_ref[...]       # [ll_r | hf_r]

    hf_new = jnp.clip(hf_ref[...] + scaled, -1.0, 1.0)
    stored = (hf_new + 1.0) * 0.5            # what the module writes to coeffs
    hf_rt = stored * 2.0 - 1.0               # what iwt_level reads back

    m = mask_ref[...]                        # 0 on ll rows, 1 on hf rows
    feats = scaled + m * (hf_rt - scaled)    # exact blend: [ll_r | hf_new]

    # Haar inverse wavelet transform, lane-dense result for the store.
    out_ref[...] = jnp.dot(iwt_ref[...], feats,
                           preferred_element_type=jnp.float32)


# ------------------------------- glue wrapper --------------------------------

def make_params(w_ll, b_ll, w_hf, b_hf, hf_scale):
    """Fold both conv heads + per-channel constants into kernel-ready arrays."""
    cin = w_ll.shape[1]
    w_comb = jnp.concatenate([w_ll, w_hf], axis=0)               # (12,cin,3,3) OIHW
    # K order (ky, kx, ci) to match the im2col row order.
    w_flat = jnp.transpose(w_comb, (0, 2, 3, 1)).reshape(TOT_CH, K_TAPS * cin)
    bias = jnp.concatenate([b_ll, b_hf], axis=0).reshape(TOT_CH, 1)
    s = jnp.abs(hf_scale).astype(jnp.float32)
    chan_scale = jnp.concatenate(
        [jnp.ones((LL_CH, 1), jnp.float32),
         s * jnp.ones((HF_CH, 1), jnp.float32)], axis=0)
    hf_mask = jnp.concatenate(
        [jnp.zeros((LL_CH, 1), jnp.float32),
         jnp.ones((HF_CH, 1), jnp.float32)], axis=0)
    return dict(w_flat=w_flat, bias=bias, chan_scale=chan_scale,
                hf_mask=hf_mask, iwt_t=jnp.asarray(_iwt_matrix_T()))


def decoder_block_apply(fused_nchw, coeffs, params):
    """Equivalent of DecoderBlock.forward(fused, coeffs) for single-level coeffs."""
    # TODO(synk): only single-level coeffs (len(coeffs) == 1, Haar) are handled;
    # deeper multi_iwt_mixed levels would need repeated iwt passes.
    assert len(coeffs) == 1
    _ll_unused, hf_nchw, wname = coeffs[-1]
    assert wname == "haar"

    B, cin, H, W = fused_nchw.shape
    n_flat = B * H * W
    tn = min(LANE_TILE_MAX, _round_up(n_flat, 512))
    n_pad = _round_up(n_flat, tn)

    # ---- im2col slab (36, B*H*W): rows = (ky, kx, ci), lanes = (b, y, x) ----
    # Built once in plain XLA so the kernel never materializes shifted slices.
    f_cm = jnp.transpose(fused_nchw, (1, 0, 2, 3))               # (cin, B, H, W)
    f_cm = jnp.pad(f_cm, ((0, 0), (0, 0), (1, 1), (1, 1)))       # conv padding=1
    taps = [f_cm[:, :, ky:ky + H, kx:kx + W]
            for ky in range(3) for kx in range(3)]
    x_cm = jnp.stack(taps, axis=0).reshape(K_TAPS * cin, n_flat)

    # ---- hf in channel-major (12, N), pre-shifted to [-1, 1]; dummy ll rows 0 ----
    hf_cm = jnp.transpose(hf_nchw, (1, 0, 2, 3)).reshape(HF_CH, n_flat)
    hf_stk = jnp.concatenate(
        [jnp.zeros((LL_CH, n_flat), jnp.float32), hf_cm * 2.0 - 1.0], axis=0)

    if n_pad != n_flat:                                          # lane padding
        x_cm = jnp.pad(x_cm, ((0, 0), (0, n_pad - n_flat)))
        hf_stk = jnp.pad(hf_stk, ((0, 0), (0, n_pad - n_flat)))

    rec = pl.pallas_call(
        decoder_kernel,
        out_shape=jax.ShapeDtypeStruct((TOT_CH, n_pad), jnp.float32),
        grid=(n_pad // tn,),
        in_specs=[
            pl.BlockSpec((K_TAPS * cin, tn), lambda n: (0, n)),
            pl.BlockSpec((TOT_CH, tn), lambda n: (0, n)),
            pl.BlockSpec((TOT_CH, K_TAPS * cin), lambda n: (0, 0)),
            pl.BlockSpec((TOT_CH, 1), lambda n: (0, 0)),
            pl.BlockSpec((TOT_CH, 1), lambda n: (0, 0)),
            pl.BlockSpec((TOT_CH, 1), lambda n: (0, 0)),
            pl.BlockSpec((TOT_CH, TOT_CH), lambda n: (0, 0)),
        ],
        out_specs=pl.BlockSpec((TOT_CH, tn), lambda n: (0, n)),
        compiler_params=pltpu.CompilerParams(
            dimension_semantics=("parallel",)),
    )(x_cm, hf_stk, params["w_flat"], params["bias"], params["chan_scale"],
      params["hf_mask"], params["iwt_t"])

    # rows = (c, dy, dx), lanes = (b, y, x)  ->  out[b, c, 2y+dy, 2x+dx]
    # (the 2x2 pixel interleave is inherent; done by XLA on the small output)
    rec = rec[:, :n_flat].reshape(LL_CH, 2, 2, B, H, W)
    out = jnp.transpose(rec, (3, 0, 4, 1, 5, 2)).reshape(B, LL_CH, 2 * H, 2 * W)
    return out


# ------------------------- pure-JAX reference (check) ------------------------

def _iwt_level_ref(ll, hf_unit):
    hf = hf_unit * 2.0 - 1.0
    inv = jnp.asarray(_haar_inverse_filters())
    B, C, H, W = ll.shape
    recs = []
    for i in range(C):
        coeff = jnp.concatenate([ll[:, i:i + 1], hf[:, 3 * i:3 * i + 3]], axis=1)
        rec = jnp.einsum("bchw,cyx->bhywx", coeff, inv).reshape(B, 2 * H, 2 * W)
        recs.append(rec[:, None])
    return jnp.concatenate(recs, axis=1)


def decoder_block_ref(fused, hf_unit, w_ll, b_ll, w_hf, b_hf, hf_scale):
    dn = ("NCHW", "OIHW", "NCHW")
    ll_r = jnp.tanh(
        lax.conv_general_dilated(fused, w_ll, (1, 1), ((1, 1), (1, 1)),
                                 dimension_numbers=dn)
        + b_ll[None, :, None, None])
    hf_r = jnp.tanh(
        lax.conv_general_dilated(fused, w_hf, (1, 1), ((1, 1), (1, 1)),
                                 dimension_numbers=dn)
        + b_hf[None, :, None, None]) * jnp.abs(hf_scale)
    hf_new = jnp.clip(hf_unit * 2.0 - 1.0 + hf_r, -1.0, 1.0)
    return _iwt_level_ref(ll_r, (hf_new + 1.0) * 0.5)


# ----------------------------------- main ------------------------------------

if __name__ == "__main__":
    key = jax.random.PRNGKey(0)
    B, H, W = 2, 16, 16
    kf, kh, k1, k2, k3, k4 = jax.random.split(key, 6)

    fused = jax.random.normal(kf, (B, IN_CH, H, W), jnp.float32)
    hf_unit = jax.random.uniform(kh, (B, HF_CH, H, W), jnp.float32)
    ll_dummy = jnp.zeros((B, LL_CH, H, W), jnp.float32)   # unused by forward

    # deterministic synthetic parameters (shapes from DecoderBlock.__init__)
    w_ll = 0.1 * jax.random.normal(k1, (LL_CH, IN_CH, 3, 3), jnp.float32)
    b_ll = 0.1 * jax.random.normal(k2, (LL_CH,), jnp.float32)
    w_hf = 0.1 * jax.random.normal(k3, (HF_CH, IN_CH, 3, 3), jnp.float32)
    b_hf = 0.1 * jax.random.normal(k4, (HF_CH,), jnp.float32)
    hf_scale = jnp.float32(0.1)

    params = make_params(w_ll, b_ll, w_hf, b_hf, hf_scale)
    coeffs = [(ll_dummy, hf_unit, "haar")]

    out = decoder_block_apply(fused, coeffs, params)
    out = jax.block_until_ready(out)
    assert out.shape == (B, LL_CH, 2 * H, 2 * W), out.shape

    ref = decoder_block_ref(fused, hf_unit, w_ll, b_ll, w_hf, b_hf, hf_scale)
    err = float(jnp.max(jnp.abs(out - ref)))
    assert err < 1e-3, f"max abs err {err}"

    print("KERNEL_OK")
</pallas_src>

<mosaic_0001>
module attributes {stable_mosaic.version = 11 : i64} {
  func.func @decoder_kernel(%arg0: i32, %arg1: memref<36x512xf32, #tpu.memory_space<vmem>>, %arg2: memref<12x512xf32, #tpu.memory_space<vmem>>, %arg3: memref<12x36xf32, #tpu.memory_space<vmem>>, %arg4: memref<12x1xf32, #tpu.memory_space<vmem>>, %arg5: memref<12x1xf32, #tpu.memory_space<vmem>>, %arg6: memref<12x1xf32, #tpu.memory_space<vmem>>, %arg7: memref<12x12xf32, #tpu.memory_space<vmem>>, %arg8: memref<12x512xf32, #tpu.memory_space<vmem>>) attributes {dimension_semantics = [#tpu.dimension_semantics<parallel>], iteration_bounds = array<i64: 1>, scalar_prefetch = 0 : i64, scratch_operands = 0 : i64, tpu.core_type = #tpu.core_type<tc>, window_params = [{transform_indices = @transform_0, window_bounds = array<i64: 36, 512>}, {transform_indices = @transform_1, window_bounds = array<i64: 12, 512>}, {pipeline_mode = #tpu.pipeline_mode<synchronous>, transform_indices = @transform_2, window_bounds = array<i64: 12, 36>}, {pipeline_mode = #tpu.pipeline_mode<synchronous>, transform_indices = @transform_3, window_bounds = array<i64: 12, 1>}, {pipeline_mode = #tpu.pipeline_mode<synchronous>, transform_indices = @transform_4, window_bounds = array<i64: 12, 1>}, {pipeline_mode = #tpu.pipeline_mode<synchronous>, transform_indices = @transform_5, window_bounds = array<i64: 12, 1>}, {pipeline_mode = #tpu.pipeline_mode<synchronous>, transform_indices = @transform_6, window_bounds = array<i64: 12, 12>}, {transform_indices = @transform_7, window_bounds = array<i64: 12, 512>}]} {
    %c0 = arith.constant 0 : index
    %c0_0 = arith.constant 0 : index
    %0 = vector.load %arg3[%c0, %c0_0] : memref<12x36xf32, #tpu.memory_space<vmem>>, vector<12x36xf32>
    %c0_1 = arith.constant 0 : index
    %c0_2 = arith.constant 0 : index
    %1 = vector.load %arg1[%c0_1, %c0_2] : memref<36x512xf32, #tpu.memory_space<vmem>>, vector<36x512xf32>
    %cst = arith.constant dense<0.000000e+00> : vector<12x512xf32>
    %2 = tpu.matmul %0, %1, %cst {dimension_numbers = #tpu.dot_dimension_numbers<[1], [0], [0], [1], [0, 0, 1, 1], [], []>} : vector<12x36xf32>, vector<36x512xf32>, vector<12x512xf32> -> vector<12x512xf32>
    %c0_3 = arith.constant 0 : index
    %c0_4 = arith.constant 0 : index
    %3 = vector.load %arg4[%c0_3, %c0_4] : memref<12x1xf32, #tpu.memory_space<vmem>>, vector<12x1xf32>
    %4 = vector.broadcast %3 : vector<12x1xf32> to vector<12x512xf32>
    %5 = arith.addf %2, %4 : vector<12x512xf32>
    %6 = math.tanh %5 : vector<12x512xf32>
    %c0_5 = arith.constant 0 : index
    %c0_6 = arith.constant 0 : index
    %7 = vector.load %arg5[%c0_5, %c0_6] : memref<12x1xf32, #tpu.memory_space<vmem>>, vector<12x1xf32>
    %8 = vector.broadcast %7 : vector<12x1xf32> to vector<12x512xf32>
    %9 = arith.mulf %6, %8 : vector<12x512xf32>
    %c0_7 = arith.constant 0 : index
    %c0_8 = arith.constant 0 : index
    %10 = vector.load %arg2[%c0_7, %c0_8] : memref<12x512xf32, #tpu.memory_space<vmem>>, vector<12x512xf32>
    %11 = arith.addf %10, %9 : vector<12x512xf32>
    %cst_9 = arith.constant -1.000000e+00 : f32
    %cst_10 = arith.constant 1.000000e+00 : f32
    %12 = vector.broadcast %cst_9 : f32 to vector<12x512xf32>
    %13 = arith.maximumf %12, %11 : vector<12x512xf32>
    %14 = vector.broadcast %cst_10 : f32 to vector<12x512xf32>
    %15 = arith.minimumf %14, %13 : vector<12x512xf32>
    %cst_11 = arith.constant 1.000000e+00 : f32
    %16 = vector.broadcast %cst_11 : f32 to vector<12x512xf32>
    %17 = arith.addf %15, %16 : vector<12x512xf32>
    %cst_12 = arith.constant 5.000000e-01 : f32
    %18 = vector.broadcast %cst_12 : f32 to vector<12x512xf32>
    %19 = arith.mulf %17, %18 : vector<12x512xf32>
    %cst_13 = arith.constant 2.000000e+00 : f32
    %20 = vector.broadcast %cst_13 : f32 to vector<12x512xf32>
    %21 = arith.mulf %19, %20 : vector<12x512xf32>
    %cst_14 = arith.constant 1.000000e+00 : f32
    %22 = vector.broadcast %cst_14 : f32 to vector<12x512xf32>
    %23 = arith.subf %21, %22 : vector<12x512xf32>
    %c0_15 = arith.constant 0 : index
    %c0_16 = arith.constant 0 : index
    %24 = vector.load %arg6[%c0_15, %c0_16] : memref<12x1xf32, #tpu.memory_space<vmem>>, vector<12x1xf32>
    %25 = arith.subf %23, %9 : vector<12x512xf32>
    %26 = vector.broadcast %24 : vector<12x1xf32> to vector<12x512xf32>
    %27 = arith.mulf %26, %25 : vector<12x512xf32>
    %28 = arith.addf %9, %27 : vector<12x512xf32>
    %c0_17 = arith.constant 0 : index
    %c0_18 = arith.constant 0 : index
    %29 = vector.load %arg7[%c0_17, %c0_18] : memref<12x12xf32, #tpu.memory_space<vmem>>, vector<12x12xf32>
    %cst_19 = arith.constant dense<0.000000e+00> : vector<12x512xf32>
    %30 = tpu.matmul %29, %28, %cst_19 {dimension_numbers = #tpu.dot_dimension_numbers<[1], [0], [0], [1], [0, 0, 1, 1], [], []>} : vector<12x12xf32>, vector<12x512xf32>, vector<12x512xf32> -> vector<12x512xf32>
    %c0_20 = arith.constant 0 : index
    %c0_21 = arith.constant 0 : index
    %31 = vector.load %arg8[%c0_20, %c0_21] : memref<12x512xf32, #tpu.memory_space<vmem>>, vector<12x512xf32>
    tpu.vector_store %arg8[%c0_20, %c0_21], %30 {strides = array<i32>} : memref<12x512xf32, #tpu.memory_space<vmem>>, vector<12x512xf32>,
    return
  }
  func.func @transform_0(%arg0: i32) -> (i32, i32) {
    %c0_i32 = arith.constant 0 : i32
    %c0_i32_0 = arith.constant 0 : i32
    return %c0_i32, %arg0 : i32, i32
  }
  func.func @transform_1(%arg0: i32) -> (i32, i32) {
    %c0_i32 = arith.constant 0 : i32
    %c0_i32_0 = arith.constant 0 : i32
    return %c0_i32, %arg0 : i32, i32
  }
  func.func @transform_2(%arg0: i32) -> (i32, i32) {
    %c0_i32 = arith.constant 0 : i32
    %c0_i32_0 = arith.constant 0 : i32
    %c0_i32_1 = arith.constant 0 : i32
    return %c0_i32, %c0_i32_0 : i32, i32
  }
  func.func @transform_3(%arg0: i32) -> (i32, i32) {
    %c0_i32 = arith.constant 0 : i32
    %c0_i32_0 = arith.constant 0 : i32
    %c0_i32_1 = arith.constant 0 : i32
    return %c0_i32, %c0_i32_0 : i32, i32
  }
  func.func @transform_4(%arg0: i32) -> (i32, i32) {
    %c0_i32 = arith.constant 0 : i32
    %c0_i32_0 = arith.constant 0 : i32
    %c0_i32_1 = arith.constant 0 : i32
    return %c0_i32, %c0_i32_0 : i32, i32
  }
  func.func @transform_5(%arg0: i32) -> (i32, i32) {
    %c0_i32 = arith.constant 0 : i32
    %c0_i32_0 = arith.constant 0 : i32
    %c0_i32_1 = arith.constant 0 : i32
    return %c0_i32, %c0_i32_0 : i32, i32
  }
  func.func @transform_6(%arg0: i32) -> (i32, i32) {
    %c0_i32 = arith.constant 0 : i32
    %c0_i32_0 = arith.constant 0 : i32
    %c0_i32_1 = arith.constant 0 : i32
    return %c0_i32, %c0_i32_0 : i32, i32
  }
  func.func @transform_7(%arg0: i32) -> (i32, i32) {
    %c0_i32 = arith.constant 0 : i32
    %c0_i32_0 = arith.constant 0 : i32
    return %c0_i32, %arg0 : i32, i32
  }
}

</mosaic_0001>

<llo_original>
// kernel: tpu_custom_call.1
$region0: #{tpu_custom_call.1}
  #allocation0 [shape = 'u32[]', space=smem, size = 0x4, offset = 0x4, fixed_abs, tag = 'smem constant byte address 0x4 - core index']
  #allocation1 [shape = 'u32[144,128]{1,0:T(1,128)}', space=vmem, size = 0x12000, scoped, tag = 'internal scratch']
  %s0 = inlined_call_operand.hbm [shape: f32[36,512], index: 0, kind: input, shape index: {}]
  %s1 = inlined_call_operand.hbm [shape: f32[12,512], index: 1, kind: input, shape index: {}]
  %s2 = inlined_call_operand.vmem [shape: f32[12,36], index: 2, kind: input, shape index: {}]
  %s3 = inlined_call_operand.vmem [shape: f32[12,1], index: 3, kind: input, shape index: {}]
  %s4 = inlined_call_operand.vmem [shape: f32[12,1], index: 4, kind: input, shape index: {}]
  %s5 = inlined_call_operand.vmem [shape: f32[12,1], index: 5, kind: input, shape index: {}]
  %s6 = inlined_call_operand.vmem [shape: f32[12,12], index: 6, kind: input, shape index: {}]
  %s7 = inlined_call_operand.hbm [shape: f32[12,512], index: 7, kind: output, shape index: {}]
  %s8 = sld [smem:[#allocation0]]
  $region46: #{tpu_custom_call.1} parent=0
    _
  %s10 = ssub.s32 1, %s8
  %s11 = scalar_select 0, %s10, %s8
  $region1: #{tpu_custom_call.1} parent=0
    #allocation2 [shape = 'u8[81920]{0}', space=vmem, size = 0x14000, scoped, tag = 'input window, operand 0, single buffered']
    #allocation3 [shape = 's32[1]{0}', space=sflag, size = 0x4, scoped, tag = 'scoped memory for tpu_custom_call.1']
    #allocation4 [shape = 's32[1]{0}', space=sflag, size = 0x4, scoped, tag = 'scoped memory for tpu_custom_call.1']
    #allocation5 [shape = 'u8[32768]{0}', space=vmem, size = 0x8000, scoped, tag = 'input window, operand 1, single buffered']
    #allocation6 [shape = 's32[1]{0}', space=sflag, size = 0x4, scoped, tag = 'scoped memory for tpu_custom_call.1']
    #allocation7 [shape = 'u8[32768]{0}', space=vmem, size = 0x8000, scoped, tag = 'output window, operand 0, single buffered']
    %12 = vsyncpa [#allocation3], 0
    %13 = vsyncpa [#allocation6], 0
    %14 = vsyncpa [#allocation4], 0
    // Predicated region
    $region2: #{tpu_custom_call.1} parent=1 // pred_check
      _
    $region3: #{tpu_custom_call.1} parent=1 // pred_check_branch
      %16 = sbr.rel (0) target = $region5
    $region4: #{tpu_custom_call.1} parent=1 // pred_region
      %s18 = ssub.s32 2560, 2560
      %19 = vsyncadd [#allocation3], %s18
      %s20 = sshll.u32 [#allocation2], 4
      %s21 = int_to_ptr.vmem [resolvable:$true] %s20
      %26 = dma.hbm_to_vmem [thread:$0]  %s0, 2560, %s21, [#allocation3], 512, 512, 32
    $region5: #{tpu_custom_call.1} parent=1 // pred_fallthru
      _
    // Predicated region
    $region6: #{tpu_custom_call.1} parent=1 // pred_check
      _
    $region7: #{tpu_custom_call.1} parent=1 // pred_check_branch
      %28 = sbr.rel (0) target = $region9
    $region8: #{tpu_custom_call.1} parent=1 // pred_region
      %s30 = ssub.s32 1024, 1024
      %31 = vsyncadd [#allocation6], %s30
      %s32 = sshll.u32 [#allocation5], 4
      %s33 = int_to_ptr.vmem [resolvable:$true] %s32
      %38 = dma.hbm_to_vmem [thread:$0]  %s1, 1024, %s33, [#allocation6], 512, 512, 32
    $region9: #{tpu_custom_call.1} parent=1 // pred_fallthru
      _
    // Predicated region
    $region10: #{tpu_custom_call.1} parent=1 // pred_check
      _
    $region11: #{tpu_custom_call.1} parent=1 // pred_check_branch
      %40 = sbr.rel (0) target = $region13
    $region12: #{tpu_custom_call.1} parent=1 // pred_region
      _
    $region13: #{tpu_custom_call.1} parent=1 // pred_fallthru
      _
    // Predicated region
    $region14: #{tpu_custom_call.1} parent=1 // pred_check
      _
    $region15: #{tpu_custom_call.1} parent=1 // pred_check_branch
      %42 = sbr.rel (0) target = $region17
    $region16: #{tpu_custom_call.1} parent=1 // pred_region
      _
    $region17: #{tpu_custom_call.1} parent=1 // pred_fallthru
      _
    // Predicated region
    $region18: #{tpu_custom_call.1} parent=1 // pred_check
      _
    $region19: #{tpu_custom_call.1} parent=1 // pred_check_branch
      %44 = sbr.rel (0) target = $region21
    $region20: #{tpu_custom_call.1} parent=1 // pred_region
      _
    $region21: #{tpu_custom_call.1} parent=1 // pred_fallthru
      _
    // Predicated region
    $region22: #{tpu_custom_call.1} parent=1 // pred_check
      _
    $region23: #{tpu_custom_call.1} parent=1 // pred_check_branch
      %46 = sbr.rel (0) target = $region25
    $region24: #{tpu_custom_call.1} parent=1 // pred_region
      _
    $region25: #{tpu_custom_call.1} parent=1 // pred_fallthru
      _
    // Predicated region
    $region26: #{tpu_custom_call.1} parent=1 // pred_check
      _
    $region27: #{tpu_custom_call.1} parent=1 // pred_check_branch
      %48 = sbr.rel (0) target = $region29
    $region28: #{tpu_custom_call.1} parent=1 // pred_region
      _
    $region29: #{tpu_custom_call.1} parent=1 // pred_fallthru
      _
    // Predicated region
    $region30: #{tpu_custom_call.1} parent=1 // pred_check
      _
    $region31: #{tpu_custom_call.1} parent=1 // pred_check_branch
      %50 = sbr.rel (0) target = $region33
    $region32: #{tpu_custom_call.1} parent=1 // pred_region
      %51 = dma.done [#allocation3], 2560
    $region33: #{tpu_custom_call.1} parent=1 // pred_fallthru
      _
    // Predicated region
    $region34: #{tpu_custom_call.1} parent=1 // pred_check
      _
    $region35: #{tpu_custom_call.1} parent=1 // pred_check_branch
      %53 = sbr.rel (0) target = $region37
    $region36: #{tpu_custom_call.1} parent=1 // pred_region
      %54 = dma.done [#allocation6], 1024
    $region37: #{tpu_custom_call.1} parent=1 // pred_fallthru
      _
    %v55 = vld [vmem:[%s2] sm:$0xff]
    %v56 = vld [vmem:[%s2 + $0x8] sm:$0xf]
    %v57 = vld [vmem:[#allocation2] sm:$0xff]
    %v58 = vld [vmem:[#allocation2 + $0x8] sm:$0xff]
    %v59 = vld [vmem:[#allocation2 + $0x10] sm:$0xff]
    %v60 = vld [vmem:[#allocation2 + $0x18] sm:$0xff]
    %v61 = vld [vmem:[#allocation2 + $0x20] sm:$0xff]
    %v62 = vld [vmem:[#allocation2 + $0x28] sm:$0xff]
    %v63 = vld [vmem:[#allocation2 + $0x30] sm:$0xff]
    %v64 = vld [vmem:[#allocation2 + $0x38] sm:$0xff]
    %v65 = vld [vmem:[#allocation2 + $0x40] sm:$0xff]
    %v66 = vld [vmem:[#allocation2 + $0x48] sm:$0xff]
    %v67 = vld [vmem:[#allocation2 + $0x50] sm:$0xff]
    %v68 = vld [vmem:[#allocation2 + $0x58] sm:$0xff]
    %v69 = vld [vmem:[#allocation2 + $0x60] sm:$0xff]
    %v70 = vld [vmem:[#allocation2 + $0x68] sm:$0xff]
    %v71 = vld [vmem:[#allocation2 + $0x70] sm:$0xff]
    %v72 = vld [vmem:[#allocation2 + $0x78] sm:$0xff]
    %v73 = vld [vmem:[#allocation2 + $0x80] sm:$0xf]
    %v74 = vld [vmem:[#allocation2 + $0x88] sm:$0xf]
    %v75 = vld [vmem:[#allocation2 + $0x90] sm:$0xf]
    %v76 = vld [vmem:[#allocation2 + $0x98] sm:$0xf]
    %v77 = vld [vmem:[%s3] sm:$0xff]
    %v78 = vld [vmem:[%s3 + $0x8] sm:$0xf]
    %80 = vset.pattern.permute.xlu0 0
    %81 = vperm.xlu0 %80, %v77
    %v82 = vpop.permute.xlu0 %81
    %85 = vset.pattern.permute.xlu0 0
    %86 = vperm.xlu0 %85, %v78
    %v87 = vpop.permute.xlu0 %86
    %vm89 = vcmask 293888
    %v91 = vsel %vm89, %v55, 0
    %v94 = vsel %vm89, %v56, 0
    %vm96 = vcmask 1043456
    %v98 = vsel %vm96, %v73, 0
    %v101 = vsel %vm96, %v74, 0
    %v104 = vsel %vm96, %v75, 0
    %v107 = vsel %vm96, %v76, 0
    %109 = vmatprep.subr.mxu0 0.0
    %110 = vmatpush1.msra.mxu0 0.0
    %111 = vmatprep.subr.mxu0 0.0
    %112 = vmatpush1.msra.mxu0 0.0
    %113 = vmatprep.subr.mxu0 0.0
    %114 = vmatpush1.msra.mxu0 0.0
    %115 = vmatprep.subr.mxu0 0.0
    %116 = vmatpush1.msra.mxu0 0.0
    %117 = vmatprep.subr.mxu0 0.0
    %118 = vmatpush1.msra.mxu0 0.0
    %119 = vmatprep.subr.mxu0 0.0
    %120 = vmatpush1.msra.mxu0 0.0
    %121 = vmatprep.subr.mxu0 0.0
    %122 = vmatpush1.msra.mxu0 0.0
    %123 = vmatprep.subr.mxu0 0.0
    %124 = vmatpush1.msra.mxu0 0.0
    %125 = vmatprep.subr.mxu0 0.0
    %126 = vmatpush1.msra.mxu0 0.0
    %127 = vmatprep.subr.mxu0 0.0
    %128 = vmatpush1.msra.mxu0 0.0
    %129 = vmatprep.subr.mxu0 0.0
    %130 = vmatpush1.msra.mxu0 0.0
    %131 = vmatprep.subr.mxu0 %v101
    %132 = vmatpush1.msra.mxu0 %v98
    %133 = vmatprep.subr.mxu0 %v70
    %134 = vmatpush1.msra.mxu0 %v69
    %135 = vmatprep.subr.mxu0 %v66
    %136 = vmatpush1.msra.mxu0 %v65
    %137 = vmatprep.subr.mxu0 %v62
    %138 = vmatpush1.msra.mxu0 %v61
    %139 = vmatprep.subr.mxu0 %v58
    %140 = vmatpush1.msra.mxu0 %v57
    %141 = vmatprep.subr.mxu0 0.0
    %142 = vmatpush2.msra.mxu0 0.0
    %143 = vmatprep.subr.mxu0 0.0
    %144 = vmatpush2.msra.mxu0 0.0
    %145 = vmatprep.subr.mxu0 0.0
    %146 = vmatpush2.msra.mxu0 0.0
    %147 = vmatprep.subr.mxu0 0.0
    %148 = vmatpush2.msra.mxu0 0.0
    %149 = vmatprep.subr.mxu0 0.0
    %150 = vmatpush2.msra.mxu0 0.0
    %151 = vmatprep.subr.mxu0 0.0
    %152 = vmatpush2.msra.mxu0 0.0
    %153 = vmatprep.subr.mxu0 0.0
    %154 = vmatpush2.msra.mxu0 0.0
    %155 = vmatprep.subr.mxu0 0.0
    %156 = vmatpush2.msra.mxu0 0.0
    %157 = vmatprep.subr.mxu0 0.0
    %158 = vmatpush2.msra.mxu0 0.0
    %159 = vmatprep.subr.mxu0 0.0
    %160 = vmatpush2.msra.mxu0 0.0
    %161 = vmatprep.subr.mxu0 0.0
    %162 = vmatpush2.msra.mxu0 0.0
    %163 = vmatprep.subr.mxu0 0.0
    %164 = vmatpush2.msra.mxu0 0.0
    %165 = vmatprep.subr.mxu0 0.0
    %166 = vmatpush2.msra.mxu0 0.0
    %167 = vmatprep.subr.mxu0 0.0
    %168 = vmatpush2.msra.mxu0 0.0
    %169 = vmatprep.subr.mxu0 0.0
    %170 = vmatpush2.msra.mxu0 0.0
    %171 = vmatprep.subr.mxu0 0.0
    %172 = vmatpush2.msra.mxu0 0.0
    %173 = vmatprep.mubr.f32.mxu0 0.0
    %174 = vmatmul.mubr.f32.gmra.mxu0 %v91
    %v175 = vpop.f32.mrf.mxu0
    %v176 = vadd.f32 %v82, %v175
    %v177 = vpop.f32.mrf.mxu0
    %v178 = vadd.f32 %v82, %v177
    %179 = vmatprep.mubr.f32.mxu0 0.0
    %180 = vmatmul.mubr.f32.gmra.mxu0 %v94
    %v181 = vpop.f32.mrf.mxu0
    %v182 = vadd.f32 %v87, %v181
    %v183 = vpop.f32.mrf.mxu0
    %v184 = vadd.f32 %v87, %v183
    %185 = vdwg.mxu0
    %186 = vmatprep.subr.mxu0 0.0
    %187 = vmatpush1.msra.mxu0 0.0
    %188 = vmatprep.subr.mxu0 0.0
    %189 = vmatpush1.msra.mxu0 0.0
    %190 = vmatprep.subr.mxu0 0.0
    %191 = vmatpush1.msra.mxu0 0.0
    %192 = vmatprep.subr.mxu0 0.0
    %193 = vmatpush1.msra.mxu0 0.0
    %194 = vmatprep.subr.mxu0 0.0
    %195 = vmatpush1.msra.mxu0 0.0
    %196 = vmatprep.subr.mxu0 0.0
    %197 = vmatpush1.msra.mxu0 0.0
    %198 = vmatprep.subr.mxu0 0.0
    %199 = vmatpush1.msra.mxu0 0.0
    %200 = vmatprep.subr.mxu0 0.0
    %201 = vmatpush1.msra.mxu0 0.0
    %202 = vmatprep.subr.mxu0 0.0
    %203 = vmatpush1.msra.mxu0 0.0
    %204 = vmatprep.subr.mxu0 0.0
    %205 = vmatpush1.msra.mxu0 0.0
    %206 = vmatprep.subr.mxu0 0.0
    %207 = vmatpush1.msra.mxu0 0.0
    %208 = vmatprep.subr.mxu0 %v107
    %209 = vmatpush1.msra.mxu0 %v104
    %210 = vmatprep.subr.mxu0 %v72
    %211 = vmatpush1.msra.mxu0 %v71
    %212 = vmatprep.subr.mxu0 %v68
    %213 = vmatpush1.msra.mxu0 %v67
    %214 = vmatprep.subr.mxu0 %v64
    %215 = vmatpush1.msra.mxu0 %v63
    %216 = vmatprep.subr.mxu0 %v60
    %217 = vmatpush1.msra.mxu0 %v59
    %218 = vmatprep.subr.mxu0 0.0
    %219 = vmatpush2.msra.mxu0 0.0
    %220 = vmatprep.subr.mxu0 0.0
    %221 = vmatpush2.msra.mxu0 0.0
    %222 = vmatprep.subr.mxu0 0.0
    %223 = vmatpush2.msra.mxu0 0.0
    %224 = vmatprep.subr.mxu0 0.0
    %225 = vmatpush2.msra.mxu0 0.0
    %226 = vmatprep.subr.mxu0 0.0
    %227 = vmatpush2.msra.mxu0 0.0
    %228 = vmatprep.subr.mxu0 0.0
    %229 = vmatpush2.msra.mxu0 0.0
    %230 = vmatprep.subr.mxu0 0.0
    %231 = vmatpush2.msra.mxu0 0.0
    %232 = vmatprep.subr.mxu0 0.0
    %233 = vmatpush2.msra.mxu0 0.0
    %234 = vmatprep.subr.mxu0 0.0
    %235 = vmatpush2.msra.mxu0 0.0
    %236 = vmatprep.subr.mxu0 0.0
    %237 = vmatpush2.msra.mxu0 0.0
    %238 = vmatprep.subr.mxu0 0.0
    %239 = vmatpush2.msra.mxu0 0.0
    %240 = vmatprep.subr.mxu0 0.0
    %241 = vmatpush2.msra.mxu0 0.0
    %242 = vmatprep.subr.mxu0 0.0
    %243 = vmatpush2.msra.mxu0 0.0
    %244 = vmatprep.subr.mxu0 0.0
    %245 = vmatpush2.msra.mxu0 0.0
    %246 = vmatprep.subr.mxu0 0.0
    %247 = vmatpush2.msra.mxu0 0.0
    %248 = vmatprep.subr.mxu0 0.0
    %249 = vmatpush2.msra.mxu0 0.0
    %250 = vmatprep.mubr.f32.mxu0 0.0
    %251 = vmatmul.mubr.f32.gmra.mxu0 %v91
    %v252 = vpop.f32.mrf.mxu0
    %v253 = vadd.f32 %v82, %v252
    %v254 = vpop.f32.mrf.mxu0
    %v255 = vadd.f32 %v82, %v254
    %256 = vmatprep.mubr.f32.mxu0 0.0
    %257 = vmatmul.mubr.f32.gmra.mxu0 %v94
    %v258 = vpop.f32.mrf.mxu0
    %v259 = vadd.f32 %v87, %v258
    %v260 = vpop.f32.mrf.mxu0
    %v261 = vadd.f32 %v87, %v260
    %262 = vdwg.mxu0
    %v263 = vtanh.pop %v176
    %v264 = vtanh.pop %v178
    %v265 = vtanh.pop %v253
    %v266 = vtanh.pop %v255
    %v267 = vtanh.pop %v182
    %v268 = vtanh.pop %v184
    %v269 = vtanh.pop %v259
    %v270 = vtanh.pop %v261
    %v271 = vld [vmem:[%s4] sm:$0xff]
    %v272 = vld [vmem:[%s4 + $0x8] sm:$0xf]
    %274 = vset.pattern.permute.xlu0 0
    %275 = vperm.xlu0 %274, %v271
    %v276 = vpop.permute.xlu0 %275
    %279 = vset.pattern.permute.xlu0 0
    %280 = vperm.xlu0 %279, %v272
    %v281 = vpop.permute.xlu0 %280
    %v283 = vmul.f32 %v263, %v276
    %v284 = vmul.f32 %v264, %v276
    %v285 = vmul.f32 %v265, %v276
    %v286 = vmul.f32 %v266, %v276
    %v287 = vmul.f32 %v267, %v281
    %v288 = vmul.f32 %v268, %v281
    %v289 = vmul.f32 %v269, %v281
    %v290 = vmul.f32 %v270, %v281
    %v291 = vld [vmem:[#allocation5] sm:$0xff]
    %v292 = vld [vmem:[#allocation5 + $0x8] sm:$0xff]
    %v293 = vld [vmem:[#allocation5 + $0x10] sm:$0xff]
    %v294 = vld [vmem:[#allocation5 + $0x18] sm:$0xff]
    %v295 = vld [vmem:[#allocation5 + $0x20] sm:$0xf]
    %v296 = vld [vmem:[#allocation5 + $0x28] sm:$0xf]
    %v297 = vld [vmem:[#allocation5 + $0x30] sm:$0xf]
    %v298 = vld [vmem:[#allocation5 + $0x38] sm:$0xf]
    %v299 = vadd.f32 %v291, %v283
    %v300 = vadd.f32 %v292, %v284
    %v301 = vadd.f32 %v293, %v285
    %v302 = vadd.f32 %v294, %v286
    %v303 = vadd.f32 %v295, %v287
    %v304 = vadd.f32 %v296, %v288
    %v305 = vadd.f32 %v297, %v289
    %v306 = vadd.f32 %v298, %v290
    %v307 = vmax.f32 %v299, -1.0
    %v308 = vmax.f32 %v300, -1.0
    %v309 = vmax.f32 %v301, -1.0
    %v310 = vmax.f32 %v302, -1.0
    %v311 = vmax.f32 %v303, -1.0
    %v312 = vmax.f32 %v304, -1.0
    %v313 = vmax.f32 %v305, -1.0
    %v314 = vmax.f32 %v306, -1.0
    %v315 = vmin.f32 %v307, 1.0
    %v316 = vmin.f32 %v308, 1.0
    %v317 = vmin.f32 %v309, 1.0
    %v318 = vmin.f32 %v310, 1.0
    %v319 = vmin.f32 %v311, 1.0
    %v320 = vmin.f32 %v312, 1.0
    %v321 = vmin.f32 %v313, 1.0
    %v322 = vmin.f32 %v314, 1.0
    %v323 = vadd.f32 %v315, 1.0
    %v324 = vadd.f32 %v316, 1.0
    %v325 = vadd.f32 %v317, 1.0
    %v326 = vadd.f32 %v318, 1.0
    %v327 = vadd.f32 %v319, 1.0
    %v328 = vadd.f32 %v320, 1.0
    %v329 = vadd.f32 %v321, 1.0
    %v330 = vadd.f32 %v322, 1.0
    %v331 = vmul.f32 %v323, 0.5
    %v332 = vmul.f32 %v324, 0.5
    %v333 = vmul.f32 %v325, 0.5
    %v334 = vmul.f32 %v326, 0.5
    %v335 = vmul.f32 %v327, 0.5
    %v336 = vmul.f32 %v328, 0.5
    %v337 = vmul.f32 %v329, 0.5
    %v338 = vmul.f32 %v330, 0.5
    %v339 = vmul.f32 %v331, 2.0
    %v340 = vmul.f32 %v332, 2.0
    %v341 = vmul.f32 %v333, 2.0
    %v342 = vmul.f32 %v334, 2.0
    %v343 = vmul.f32 %v335, 2.0
    %v344 = vmul.f32 %v336, 2.0
    %v345 = vmul.f32 %v337, 2.0
    %v346 = vmul.f32 %v338, 2.0
    %v347 = vsub.f32 %v339, 1.0
    %v348 = vsub.f32 %v340, 1.0
    %v349 = vsub.f32 %v341, 1.0
    %v350 = vsub.f32 %v342, 1.0
    %v351 = vsub.f32 %v343, 1.0
    %v352 = vsub.f32 %v344, 1.0
    %v353 = vsub.f32 %v345, 1.0
    %v354 = vsub.f32 %v346, 1.0
    %v355 = vld [vmem:[%s5] sm:$0xff]
    %v356 = vld [vmem:[%s5 + $0x8] sm:$0xf]
    %v357 = vsub.f32 %v347, %v283
    %v358 = vsub.f32 %v348, %v284
    %v359 = vsub.f32 %v349, %v285
    %v360 = vsub.f32 %v350, %v286
    %v361 = vsub.f32 %v351, %v287
    %v362 = vsub.f32 %v352, %v288
    %v363 = vsub.f32 %v353, %v289
    %v364 = vsub.f32 %v354, %v290
    %366 = vset.pattern.permute.xlu0 0
    %367 = vperm.xlu0 %366, %v355
    %v368 = vpop.permute.xlu0 %367
    %371 = vset.pattern.permute.xlu0 0
    %372 = vperm.xlu0 %371, %v356
    %v373 = vpop.permute.xlu0 %372
    %v375 = vmul.f32 %v368, %v357
    %v376 = vmul.f32 %v368, %v358
    %v377 = vmul.f32 %v368, %v359
    %v378 = vmul.f32 %v368, %v360
    %v379 = vmul.f32 %v373, %v361
    %v380 = vmul.f32 %v373, %v362
    %v381 = vmul.f32 %v373, %v363
    %v382 = vmul.f32 %v373, %v364
    %v383 = vadd.f32 %v283, %v375
    %v384 = vadd.f32 %v284, %v376
    %v385 = vadd.f32 %v285, %v377
    %v386 = vadd.f32 %v286, %v378
    %v387 = vadd.f32 %v287, %v379
    %v388 = vadd.f32 %v288, %v380
    %v389 = vadd.f32 %v289, %v381
    %v390 = vadd.f32 %v290, %v382
    %v391 = vld [vmem:[%s6] sm:$0xff]
    %v392 = vld [vmem:[%s6 + $0x8] sm:$0xf]
    %vm393 = vcmask 97280
    %v395 = vsel %vm393, %v391, 0
    %v398 = vsel %vm393, %v392, 0
    %v401 = vsel %vm96, %v387, 0
    %v404 = vsel %vm96, %v388, 0
    %v407 = vsel %vm96, %v389, 0
    %v410 = vsel %vm96, %v390, 0
    %412 = vmatprep.subr.mxu0 0.0
    %413 = vmatpush1.msra.mxu0 0.0
    %414 = vmatprep.subr.mxu0 0.0
    %415 = vmatpush1.msra.mxu0 0.0
    %416 = vmatprep.subr.mxu0 0.0
    %417 = vmatpush1.msra.mxu0 0.0
    %418 = vmatprep.subr.mxu0 0.0
    %419 = vmatpush1.msra.mxu0 0.0
    %420 = vmatprep.subr.mxu0 0.0
    %421 = vmatpush1.msra.mxu0 0.0
    %422 = vmatprep.subr.mxu0 0.0
    %423 = vmatpush1.msra.mxu0 0.0
    %424 = vmatprep.subr.mxu0 0.0
    %425 = vmatpush1.msra.mxu0 0.0
    %426 = vmatprep.subr.mxu0 0.0
    %427 = vmatpush1.msra.mxu0 0.0
    %428 = vmatprep.subr.mxu0 0.0
    %429 = vmatpush1.msra.mxu0 0.0
    %430 = vmatprep.subr.mxu0 0.0
    %431 = vmatpush1.msra.mxu0 0.0
    %432 = vmatprep.subr.mxu0 0.0
    %433 = vmatpush1.msra.mxu0 0.0
    %434 = vmatprep.subr.mxu0 0.0
    %435 = vmatpush1.msra.mxu0 0.0
    %436 = vmatprep.subr.mxu0 0.0
    %437 = vmatpush1.msra.mxu0 0.0
    %438 = vmatprep.subr.mxu0 0.0
    %439 = vmatpush1.msra.mxu0 0.0
    %440 = vmatprep.subr.mxu0 %v404
    %441 = vmatpush1.msra.mxu0 %v401
    %442 = vmatprep.subr.mxu0 %v384
    %443 = vmatpush1.msra.mxu0 %v383
    %444 = vmatprep.subr.mxu0 0.0
    %445 = vmatpush2.msra.mxu0 0.0
    %446 = vmatprep.subr.mxu0 0.0
    %447 = vmatpush2.msra.mxu0 0.0
    %448 = vmatprep.subr.mxu0 0.0
    %449 = vmatpush2.msra.mxu0 0.0
    %450 = vmatprep.subr.mxu0 0.0
    %451 = vmatpush2.msra.mxu0 0.0
    %452 = vmatprep.subr.mxu0 0.0
    %453 = vmatpush2.msra.mxu0 0.0
    %454 = vmatprep.subr.mxu0 0.0
    %455 = vmatpush2.msra.mxu0 0.0
    %456 = vmatprep.subr.mxu0 0.0
    %457 = vmatpush2.msra.mxu0 0.0
    %458 = vmatprep.subr.mxu0 0.0
    %459 = vmatpush2.msra.mxu0 0.0
    %460 = vmatprep.subr.mxu0 0.0
    %461 = vmatpush2.msra.mxu0 0.0
    %462 = vmatprep.subr.mxu0 0.0
    %463 = vmatpush2.msra.mxu0 0.0
    %464 = vmatprep.subr.mxu0 0.0
    %465 = vmatpush2.msra.mxu0 0.0
    %466 = vmatprep.subr.mxu0 0.0
    %467 = vmatpush2.msra.mxu0 0.0
    %468 = vmatprep.subr.mxu0 0.0
    %469 = vmatpush2.msra.mxu0 0.0
    %470 = vmatprep.subr.mxu0 0.0
    %471 = vmatpush2.msra.mxu0 0.0
    %472 = vmatprep.subr.mxu0 0.0
    %473 = vmatpush2.msra.mxu0 0.0
    %474 = vmatprep.subr.mxu0 0.0
    %475 = vmatpush2.msra.mxu0 0.0
    %476 = vmatprep.mubr.f32.mxu0 0.0
    %477 = vmatmul.mubr.f32.gmra.mxu0 %v395
    %v478 = vpop.f32.mrf.mxu0
    %v479 = vadd.f32 0.0, %v478
    %v480 = vpop.f32.mrf.mxu0
    %v481 = vadd.f32 0.0, %v480
    %482 = vmatprep.mubr.f32.mxu0 0.0
    %483 = vmatmul.mubr.f32.gmra.mxu0 %v398
    %v484 = vpop.f32.mrf.mxu0
    %v485 = vadd.f32 0.0, %v484
    %v486 = vpop.f32.mrf.mxu0
    %v487 = vadd.f32 0.0, %v486
    %488 = vdwg.mxu0
    %489 = vmatprep.subr.mxu0 0.0
    %490 = vmatpush1.msra.mxu0 0.0
    %491 = vmatprep.subr.mxu0 0.0
    %492 = vmatpush1.msra.mxu0 0.0
    %493 = vmatprep.subr.mxu0 0.0
    %494 = vmatpush1.msra.mxu0 0.0
    %495 = vmatprep.subr.mxu0 0.0
    %496 = vmatpush1.msra.mxu0 0.0
    %497 = vmatprep.subr.mxu0 0.0
    %498 = vmatpush1.msra.mxu0 0.0
    %499 = vmatprep.subr.mxu0 0.0
    %500 = vmatpush1.msra.mxu0 0.0
    %501 = vmatprep.subr.mxu0 0.0
    %502 = vmatpush1.msra.mxu0 0.0
    %503 = vmatprep.subr.mxu0 0.0
    %504 = vmatpush1.msra.mxu0 0.0
    %505 = vmatprep.subr.mxu0 0.0
    %506 = vmatpush1.msra.mxu0 0.0
    %507 = vmatprep.subr.mxu0 0.0
    %508 = vmatpush1.msra.mxu0 0.0
    %509 = vmatprep.subr.mxu0 0.0
    %510 = vmatpush1.msra.mxu0 0.0
    %511 = vmatprep.subr.mxu0 0.0
    %512 = vmatpush1.msra.mxu0 0.0
    %513 = vmatprep.subr.mxu0 0.0
    %514 = vmatpush1.msra.mxu0 0.0
    %515 = vmatprep.subr.mxu0 0.0
    %516 = vmatpush1.msra.mxu0 0.0
    %517 = vmatprep.subr.mxu0 %v410
    %518 = vmatpush1.msra.mxu0 %v407
    %519 = vmatprep.subr.mxu0 %v386
    %520 = vmatpush1.msra.mxu0 %v385
    %521 = vmatprep.subr.mxu0 0.0
    %522 = vmatpush2.msra.mxu0 0.0
    %523 = vmatprep.subr.mxu0 0.0
    %524 = vmatpush2.msra.mxu0 0.0
    %525 = vmatprep.subr.mxu0 0.0
    %526 = vmatpush2.msra.mxu0 0.0
    %527 = vmatprep.subr.mxu0 0.0
    %528 = vmatpush2.msra.mxu0 0.0
    %529 = vmatprep.subr.mxu0 0.0
    %530 = vmatpush2.msra.mxu0 0.0
    %531 = vmatprep.subr.mxu0 0.0
    %532 = vmatpush2.msra.mxu0 0.0
    %533 = vmatprep.subr.mxu0 0.0
    %534 = vmatpush2.msra.mxu0 0.0
    %535 = vmatprep.subr.mxu0 0.0
    %536 = vmatpush2.msra.mxu0 0.0
    %537 = vmatprep.subr.mxu0 0.0
    %538 = vmatpush2.msra.mxu0 0.0
    %539 = vmatprep.subr.mxu0 0.0
    %540 = vmatpush2.msra.mxu0 0.0
    %541 = vmatprep.subr.mxu0 0.0
    %542 = vmatpush2.msra.mxu0 0.0
    %543 = vmatprep.subr.mxu0 0.0
    %544 = vmatpush2.msra.mxu0 0.0
    %545 = vmatprep.subr.mxu0 0.0
    %546 = vmatpush2.msra.mxu0 0.0
    %547 = vmatprep.subr.mxu0 0.0
    %548 = vmatpush2.msra.mxu0 0.0
    %549 = vmatprep.subr.mxu0 0.0
    %550 = vmatpush2.msra.mxu0 0.0
    %551 = vmatprep.subr.mxu0 0.0
    %552 = vmatpush2.msra.mxu0 0.0
    %553 = vmatprep.mubr.f32.mxu0 0.0
    %554 = vmatmul.mubr.f32.gmra.mxu0 %v395
    %v555 = vpop.f32.mrf.mxu0
    %v556 = vadd.f32 0.0, %v555
    %v557 = vpop.f32.mrf.mxu0
    %v558 = vadd.f32 0.0, %v557
    %559 = vmatprep.mubr.f32.mxu0 0.0
    %560 = vmatmul.mubr.f32.gmra.mxu0 %v398
    %v561 = vpop.f32.mrf.mxu0
    %v562 = vadd.f32 0.0, %v561
    %v563 = vpop.f32.mrf.mxu0
    %v564 = vadd.f32 0.0, %v563
    %565 = vdwg.mxu0
    %566 = vst [vmem:[#allocation7] sm:$0xff] %v479
    %567 = vst [vmem:[#allocation7 + $0x8] sm:$0xff] %v481
    %568 = vst [vmem:[#allocation7 + $0x10] sm:$0xff] %v556
    %569 = vst [vmem:[#allocation7 + $0x18] sm:$0xff] %v558
    %570 = vst [vmem:[#allocation7 + $0x20] sm:$0xf] %v485
    %571 = vst [vmem:[#allocation7 + $0x28] sm:$0xf] %v487
    %572 = vst [vmem:[#allocation7 + $0x30] sm:$0xf] %v562
    %573 = vst [vmem:[#allocation7 + $0x38] sm:$0xf] %v564
    // Predicated region
    $region38: #{tpu_custom_call.1} parent=1 // pred_check
      _
    $region39: #{tpu_custom_call.1} parent=1 // pred_check_branch
      %575 = sbr.rel (0) target = $region41
    $region40: #{tpu_custom_call.1} parent=1 // pred_region
      %s577 = ssub.s32 1024, 1024
      %578 = vsyncadd [#allocation4], %s577
      %s579 = sshll.u32 [#allocation7], 4
      %s580 = int_to_ptr.vmem [resolvable:$true] %s579
      %585 = dma.vmem_to_hbm [thread:$0]  %s580, 1024, %s7, [#allocation4], 512, 512, 32
    $region41: #{tpu_custom_call.1} parent=1 // pred_fallthru
      _
    // Predicated region
    $region42: #{tpu_custom_call.1} parent=1 // pred_check
      _
    $region43: #{tpu_custom_call.1} parent=1 // pred_check_branch
      %587 = sbr.rel (0) target = $region45
    $region44: #{tpu_custom_call.1} parent=1 // pred_region
      %588 = dma.done [#allocation4], 1024
    $region45: #{tpu_custom_call.1} parent=1 // pred_fallthru
      _
    %589 = vsyncpa [#allocation3], 1
    %590 = vsyncpa [#allocation6], 1
    %591 = vsyncpa [#allocation4], 1

</llo_original>
